<compile_context>
chip_gen: v7x
topology: tpu7x:2x2x1
jax: 0.10.0
libtpu: 0.0.40
codegen_flags: <defaults>
</compile_context>

<pallas_src>
import jax
import jax.numpy as jnp
from jax.experimental import pallas as pl
from jax.experimental.pallas import tpu as pltpu


def _seg_head_kernel(x_ref, w1_ref, b1_ref, wh_ref, bh_ref, out_ref):
    # x_ref:   (1, Cin, TP)  f32   pixel tile (pixels along lanes)
    # w1_ref:  (Hid, Cin)    bf16  backbone 1x1-conv weight (out, in)
    # b1_ref:  (Hid, 1)      f32
    # wh_ref:  (K, Hid)      bf16  selected head's 1x1-conv weight
    # bh_ref:  (K, 1)        f32
    # out_ref: (1, K, TP)    f32
    x = x_ref[0].astype(jnp.bfloat16)                              # in-kernel cast

    # backbone 1x1 conv (MXU, bf16 operands, f32 accumulate) + bias + ReLU
    h = jnp.dot(w1_ref[...], x, preferred_element_type=jnp.float32)
    h = jnp.maximum(h + b1_ref[...], 0.0)                          # f32 epilogue

    # selected classification head (MXU), lane-dense (K, TP) output
    y = jnp.dot(wh_ref[...], h.astype(wh_ref.dtype),
                preferred_element_type=jnp.float32)
    out_ref[0] = (y + bh_ref[...]).astype(out_ref.dtype)


def _pick_tile_p(n, c, k, p, *, target_bytes=1 << 20, max_tile=32768):
    """Pixel-tile size: ~target_bytes of HBM traffic per grid step, lane-dense."""
    per_col = (c + k) * 4                       # f32 x in + f32 out, bytes/column
    tile = max(128, min(max_tile, target_bytes // per_col))
    tile = (tile // 128) * 128                  # multiple of 128 lanes
    tile = min(tile, pl.cdiv(p, 128) * 128)     # never beyond lane-rounded extent
    # v7x has 2 TensorCores: keep >= 2 total grid steps when N == 1.
    if n == 1 and p > 128:
        half = pl.cdiv(pl.cdiv(p, 2), 128) * 128
        tile = min(tile, half)
    return max(tile, 128)


def _run_seg_head(x_ncp, w1, b1, wh, bh, *, tile_p=None):
    """x_ncp: [N, Cin, P] f32 (P = H*W).  Returns [N, K, P] f32."""
    n, c, p = x_ncp.shape
    hid = w1.shape[0]
    k = wh.shape[0]

    if tile_p is None:
        tile_p = _pick_tile_p(n, c, k, p)

    grid = (n, pl.cdiv(p, tile_p))              # partial tail block is masked

    return pl.pallas_call(
        _seg_head_kernel,
        out_shape=jax.ShapeDtypeStruct((n, k, p), jnp.float32),
        grid_spec=pltpu.PrefetchScalarGridSpec(
            num_scalar_prefetch=0,
            grid=grid,
            in_specs=[
                pl.BlockSpec((1, c, tile_p), lambda i, j: (i, 0, j)),  # x tile
                pl.BlockSpec((hid, c), lambda i, j: (0, 0)),           # w1
                pl.BlockSpec((hid, 1), lambda i, j: (0, 0)),           # b1
                pl.BlockSpec((k, hid), lambda i, j: (0, 0)),           # wh
                pl.BlockSpec((k, 1), lambda i, j: (0, 0)),             # bh
            ],
            out_specs=pl.BlockSpec((1, k, tile_p), lambda i, j: (i, 0, j)),
        ),
        compiler_params=pltpu.CompilerParams(
            dimension_semantics=("parallel", "parallel"),
            vmem_limit_bytes=32 * 1024 * 1024),
    )(x_ncp, w1, b1, wh, bh)


class SegmentationModelOutputWrapper:
    """JAX/Pallas port of the PyTorch wrapper.

    `model_params` plays the role of `self.model`; `branch` selects which head
    is returned.  `branch` is Python-static, so we specialize at construction
    time: only the selected head ('main-cls' for branch == 'x', else
    'layer-cls') is computed and written back — identical forward semantics,
    half the HBM writeback.
    """

    def __init__(self, model_params, branch):
        self.branch = branch
        # Hoist dtype conversions out of the per-call path.
        self._w1 = model_params["w1"].astype(jnp.bfloat16)
        self._b1 = model_params["b1"].astype(jnp.float32)
        if branch == 'x':
            wh, bh = model_params["wm"], model_params["bm"]   # 'main-cls'
        else:
            wh, bh = model_params["wl"], model_params["bl"]   # 'layer-cls'
        self._wh = wh.astype(jnp.bfloat16)
        self._bh = bh.astype(jnp.float32)

    def __call__(self, x):
        n, c, h, w = x.shape
        k = self._wh.shape[0]
        # NCHW viewed as [N, C, H*W] — free reshape, no transpose; the kernel
        # output [N, K, H*W] reshapes straight back to NCHW.
        x_ncp = x.reshape(n, c, h * w)
        out = _run_seg_head(x_ncp, self._w1, self._b1, self._wh, self._bh)
        return out.reshape(n, k, h, w)


def _init_params(key, cin, hid, k):
    k1, k2, k3, k4, k5, k6 = jax.random.split(key, 6)
    # PyTorch 1x1-conv weight layout (out_channels, in_channels); column biases.
    return {
        "w1": jax.random.normal(k1, (hid, cin), jnp.float32) * 0.1,
        "b1": jax.random.normal(k2, (hid, 1), jnp.float32) * 0.01,
        "wm": jax.random.normal(k3, (k, hid), jnp.float32) * 0.1,
        "bm": jax.random.normal(k4, (k, 1), jnp.float32) * 0.01,
        "wl": jax.random.normal(k5, (k, hid), jnp.float32) * 0.1,
        "bl": jax.random.normal(k6, (k, 1), jnp.float32) * 0.01,
    }


def _reference(x, params, branch):
    """Pure-JAX reference with the same bf16 operand rounding as the kernel."""
    n, c, h, w = x.shape
    wh = params["wm"] if branch == 'x' else params["wl"]
    bh = params["bm"] if branch == 'x' else params["bl"]
    k = wh.shape[0]
    bf = lambda a: a.astype(jnp.bfloat16).astype(jnp.float32)

    xr = bf(x.reshape(n, c, h * w))                               # [N, C, P]
    hdd = jnp.einsum('oc,ncp->nop', bf(params["w1"]), xr,
                     precision=jax.lax.Precision.HIGHEST) + params["b1"]
    hdd = jnp.maximum(hdd, 0.0)
    y = jnp.einsum('ko,nop->nkp', bf(wh), bf(hdd),
                   precision=jax.lax.Precision.HIGHEST) + bh
    return y.reshape(n, k, h, w)


if __name__ == "__main__":
    key = jax.random.PRNGKey(0)
    kx, kp = jax.random.split(key)

    # Small shapes: N=2, Cin=4, H=W=16, hidden=32, num_classes=8.
    N, CIN, H, W = 2, 4, 16, 16
    HID, K = 32, 8

    x = jax.random.normal(kx, (N, CIN, H, W), jnp.float32)   # NCHW like PyTorch
    params = _init_params(kp, CIN, HID, K)

    wrapper_main = SegmentationModelOutputWrapper(params, branch='x')
    wrapper_layer = SegmentationModelOutputWrapper(params, branch='layer')

    out_main = jax.block_until_ready(wrapper_main(x))    # [N, K, H, W]
    out_layer = jax.block_until_ready(wrapper_layer(x))  # [N, K, H, W]

    ref_main = _reference(x, params, 'x')
    ref_layer = _reference(x, params, 'layer')

    assert out_main.shape == (N, K, H, W)
    assert out_layer.shape == (N, K, H, W)
    assert jnp.allclose(out_main, ref_main, atol=2e-3, rtol=2e-3)
    assert jnp.allclose(out_layer, ref_layer, atol=2e-3, rtol=2e-3)

    print("KERNEL_OK")
</pallas_src>

<mosaic_0001>
module attributes {stable_mosaic.version = 11 : i64} {
  func.func @_seg_head_kernel(%arg0: i32, %arg1: i32, %arg2: memref<1x4x256xf32, #tpu.memory_space<vmem>>, %arg3: memref<32x4xbf16, #tpu.memory_space<vmem>>, %arg4: memref<32x1xf32, #tpu.memory_space<vmem>>, %arg5: memref<8x32xbf16, #tpu.memory_space<vmem>>, %arg6: memref<8x1xf32, #tpu.memory_space<vmem>>, %arg7: memref<1x8x256xf32, #tpu.memory_space<vmem>>) attributes {dimension_semantics = [#tpu.dimension_semantics<parallel>, #tpu.dimension_semantics<parallel>], iteration_bounds = array<i64: 2, 1>, scalar_prefetch = 0 : i64, scratch_operands = 0 : i64, tpu.core_type = #tpu.core_type<tc>, window_params = [{transform_indices = @transform_0, window_bounds = array<i64: 1, 4, 256>}, {pipeline_mode = #tpu.pipeline_mode<synchronous>, transform_indices = @transform_1, window_bounds = array<i64: 32, 4>}, {pipeline_mode = #tpu.pipeline_mode<synchronous>, transform_indices = @transform_2, window_bounds = array<i64: 32, 1>}, {pipeline_mode = #tpu.pipeline_mode<synchronous>, transform_indices = @transform_3, window_bounds = array<i64: 8, 32>}, {pipeline_mode = #tpu.pipeline_mode<synchronous>, transform_indices = @transform_4, window_bounds = array<i64: 8, 1>}, {transform_indices = @transform_5, window_bounds = array<i64: 1, 8, 256>}]} {
    %c0 = arith.constant 0 : index
    %c0_0 = arith.constant 0 : index
    %c0_1 = arith.constant 0 : index
    %0 = vector.load %arg2[%c0, %c0_0, %c0_1] : memref<1x4x256xf32, #tpu.memory_space<vmem>>, vector<1x4x256xf32>
    %1 = vector.shape_cast %0 : vector<1x4x256xf32> to vector<4x256xf32>
    %2 = arith.truncf %1 : vector<4x256xf32> to vector<4x256xbf16>
    %c0_2 = arith.constant 0 : index
    %c0_3 = arith.constant 0 : index
    %3 = vector.load %arg3[%c0_2, %c0_3] : memref<32x4xbf16, #tpu.memory_space<vmem>>, vector<32x4xbf16>
    %cst = arith.constant dense<0.000000e+00> : vector<32x256xf32>
    %4 = tpu.matmul %3, %2, %cst {dimension_numbers = #tpu.dot_dimension_numbers<[1], [0], [0], [1], [0, 0, 1, 1], [], []>} : vector<32x4xbf16>, vector<4x256xbf16>, vector<32x256xf32> -> vector<32x256xf32>
    %c0_4 = arith.constant 0 : index
    %c0_5 = arith.constant 0 : index
    %5 = vector.load %arg4[%c0_4, %c0_5] : memref<32x1xf32, #tpu.memory_space<vmem>>, vector<32x1xf32>
    %6 = vector.broadcast %5 : vector<32x1xf32> to vector<32x256xf32>
    %7 = arith.addf %4, %6 : vector<32x256xf32>
    %cst_6 = arith.constant 0.000000e+00 : f32
    %8 = vector.broadcast %cst_6 : f32 to vector<32x256xf32>
    %9 = arith.maximumf %7, %8 : vector<32x256xf32>
    %c0_7 = arith.constant 0 : index
    %c0_8 = arith.constant 0 : index
    %10 = vector.load %arg5[%c0_7, %c0_8] : memref<8x32xbf16, #tpu.memory_space<vmem>>, vector<8x32xbf16>
    %11 = arith.truncf %9 : vector<32x256xf32> to vector<32x256xbf16>
    %cst_9 = arith.constant dense<0.000000e+00> : vector<8x256xf32>
    %12 = tpu.matmul %10, %11, %cst_9 {dimension_numbers = #tpu.dot_dimension_numbers<[1], [0], [0], [1], [0, 0, 1, 1], [], []>} : vector<8x32xbf16>, vector<32x256xbf16>, vector<8x256xf32> -> vector<8x256xf32>
    %c0_10 = arith.constant 0 : index
    %c0_11 = arith.constant 0 : index
    %13 = vector.load %arg6[%c0_10, %c0_11] : memref<8x1xf32, #tpu.memory_space<vmem>>, vector<8x1xf32>
    %14 = vector.broadcast %13 : vector<8x1xf32> to vector<8x256xf32>
    %15 = arith.addf %12, %14 : vector<8x256xf32>
    %c0_12 = arith.constant 0 : index
    %c0_13 = arith.constant 0 : index
    %c0_14 = arith.constant 0 : index
    %16 = vector.load %arg7[%c0_12, %c0_13, %c0_14] : memref<1x8x256xf32, #tpu.memory_space<vmem>>, vector<1x8x256xf32>
    %17 = vector.shape_cast %16 : vector<1x8x256xf32> to vector<8x256xf32>
    %18 = vector.shape_cast %15 : vector<8x256xf32> to vector<1x8x256xf32>
    tpu.vector_store %arg7[%c0_12, %c0_13, %c0_14], %18 {strides = array<i32>} : memref<1x8x256xf32, #tpu.memory_space<vmem>>, vector<1x8x256xf32>,
    return
  }
  func.func @transform_0(%arg0: i32, %arg1: i32) -> (i32, i32, i32) {
    %c0_i32 = arith.constant 0 : i32
    %c0_i32_0 = arith.constant 0 : i32
    return %arg0, %c0_i32, %arg1 : i32, i32, i32
  }
  func.func @transform_1(%arg0: i32, %arg1: i32) -> (i32, i32) {
    %c0_i32 = arith.constant 0 : i32
    %c0_i32_0 = arith.constant 0 : i32
    %c0_i32_1 = arith.constant 0 : i32
    return %c0_i32, %c0_i32_0 : i32, i32
  }
  func.func @transform_2(%arg0: i32, %arg1: i32) -> (i32, i32) {
    %c0_i32 = arith.constant 0 : i32
    %c0_i32_0 = arith.constant 0 : i32
    %c0_i32_1 = arith.constant 0 : i32
    return %c0_i32, %c0_i32_0 : i32, i32
  }
  func.func @transform_3(%arg0: i32, %arg1: i32) -> (i32, i32) {
    %c0_i32 = arith.constant 0 : i32
    %c0_i32_0 = arith.constant 0 : i32
    %c0_i32_1 = arith.constant 0 : i32
    return %c0_i32, %c0_i32_0 : i32, i32
  }
  func.func @transform_4(%arg0: i32, %arg1: i32) -> (i32, i32) {
    %c0_i32 = arith.constant 0 : i32
    %c0_i32_0 = arith.constant 0 : i32
    %c0_i32_1 = arith.constant 0 : i32
    return %c0_i32, %c0_i32_0 : i32, i32
  }
  func.func @transform_5(%arg0: i32, %arg1: i32) -> (i32, i32, i32) {
    %c0_i32 = arith.constant 0 : i32
    %c0_i32_0 = arith.constant 0 : i32
    return %arg0, %c0_i32, %arg1 : i32, i32, i32
  }
}

</mosaic_0001>

<llo_original>
// kernel: tpu_custom_call.1
$region0: #{tpu_custom_call.1}
  #allocation0 [shape = 'u32[]', space=smem, size = 0x4, offset = 0x4, fixed_abs, tag = 'smem constant byte address 0x4 - core index']
  #allocation1 [shape = 'u32[144,128]{1,0:T(1,128)}', space=vmem, size = 0x12000, scoped, tag = 'internal scratch']
  %s0 = inlined_call_operand.vmem [shape: f32[2,4,256], index: 0, kind: input, shape index: {}]
  %s1 = inlined_call_operand.vmem [shape: bf16[32,4], index: 1, kind: input, shape index: {}]
  %s2 = inlined_call_operand.vmem [shape: f32[32,1], index: 2, kind: input, shape index: {}]
  %s3 = inlined_call_operand.vmem [shape: bf16[8,32], index: 3, kind: input, shape index: {}]
  %s4 = inlined_call_operand.vmem [shape: f32[8,1], index: 4, kind: input, shape index: {}]
  %s5 = inlined_call_operand.hbm [shape: f32[2,8,256], index: 5, kind: output, shape index: {}]
  %s6 = sld [smem:[#allocation0]]
  $region53: #{tpu_custom_call.1} parent=0
    _
  %s8 = ssub.s32 1, %s6
  %s9 = scalar_select 0, %s8, %s6
  $region1: #{tpu_custom_call.1} parent=0
    #allocation2 [shape = 'u8[16384]{0}', space=vmem, size = 0x4000, scoped, tag = 'output window, operand 0']
    #allocation3 [shape = 's32[2]{0}', space=sflag, size = 0x8, scoped, tag = 'scoped memory for tpu_custom_call.1']
    %10 = vsyncpa [#allocation3], 0
    %s11 = scalar_lea.sflag [#allocation3], 1
    %12 = vsyncpa %s11, 0
    loop: start=0, step=1, limit=4
    $region2: #{tpu_custom_call.1} parent=1 // loop_pre_header
      _
    $region3: #{tpu_custom_call.1} parent=1 // loop_header
      %s14 = sphi 0, %s18
      %p15 = scmp.ge.s32.totalorder %s14, 4
      %s21 = sphi 0, %s33
      %s22 = sphi 0, %s29
      %s23 = sphi 0, %s21
      %s24 = sphi 0, %s22
      %s25 = sphi 0, %s23
      %s26 = sphi 0, %s24
      %s38 = sphi 0, %s40
      %s41 = sphi 0, %s38
      %s42 = sphi 0, %s41
      %s58 = sphi 0, %s42
      %s62 = sphi 0, %s62
      %s64 = sphi 0, %s62
      %s65 = sphi 0, %s64
      %s79 = sphi 0, %s65
      %s83 = sphi 0, %s83
      %s85 = sphi 0, %s83
      %s86 = sphi 0, %s85
      %s100 = sphi 0, %s86
      %s104 = sphi 0, %s104
      %s106 = sphi 0, %s104
      %s107 = sphi 0, %s106
      %s121 = sphi 0, %s107
      %s125 = sphi 0, %s125
      %s127 = sphi 0, %s125
      %s128 = sphi 0, %s127
      %s142 = sphi 0, %s128
      %s150 = sphi 0, %s152
      %s153 = sphi 0, %s150
      %s154 = sphi 0, %s153
      %s170 = sphi 0, %s154
    $region4: #{tpu_custom_call.1} parent=1 // loop_header_branch
      %17 = sbr.rel (%p15) target = $region8
    $region5: #{tpu_custom_call.1} parent=1 // loop_body
      %s19 = ssub.s32 %s14, 1
      %s20 = ssub.s32 %s14, 2
      %s27 = sadd.s32 1, %s22
      %p28 = scmp.ge.s32.totalorder %s27, 1
      %s29 = scalar_select %p28, 0, %s27
      %s30 = sadd.s32 1, %s21
      %s31 = scalar_select %p28, %s30, %s21
      %p32 = scmp.ge.s32.totalorder %s31, 2
      %s33 = scalar_select %p32, 0, %s31
      %s34 = ssub.s32 %s21, %s33
      %s35 = ssub.s32 %s22, %s29
      %s36 = sor.u32 %s34, %s35
      %p37 = scmp.eq.s32.totalorder %s36, 0
      %s39 = sadd.s32 %s38, 1
      %s40 = scalar_select %p37, %s38, %s39
      %p43 = pneg %p37
      %p44 = scmp.eq.s32.totalorder %s14, 1
      %p45 = por %p43, %p44
      %p46 = scmp.ne.s32.totalorder %s38, %s41
      %p47 = scmp.eq.s32.totalorder %s14, 0
      %p48 = por %p46, %p47
      %p49 = scmp.ne.s32.totalorder %s38, %s41
      %p50 = scmp.eq.s32.totalorder %s19, 1
      %p51 = por %p49, %p50
      %p52 = scmp.ne.s32.totalorder %s41, %s42
      %p53 = scmp.eq.s32.totalorder %s19, 0
      %p54 = por %p52, %p53
      %p55 = scmp.ne.s32.totalorder %s41, %s42
      %p56 = scmp.eq.s32.totalorder %s20, 1
      %p57 = por %p55, %p56
      %p59 = scmp.ne.s32.totalorder %s42, %s58
      %p60 = scmp.eq.s32.totalorder %s20, 0
      %p61 = por %p59, %p60
      %s63 = sadd.s32 %s62, 1
      %p66 = scmp.eq.s32.totalorder %s14, 1
      %p67 = scmp.ne.s32.totalorder %s62, %s64
      %p68 = scmp.eq.s32.totalorder %s14, 0
      %p69 = por %p67, %p68
      %p70 = scmp.ne.s32.totalorder %s62, %s64
      %p71 = scmp.eq.s32.totalorder %s19, 1
      %p72 = por %p70, %p71
      %p73 = scmp.ne.s32.totalorder %s64, %s65
      %p74 = scmp.eq.s32.totalorder %s19, 0
      %p75 = por %p73, %p74
      %p76 = scmp.ne.s32.totalorder %s64, %s65
      %p77 = scmp.eq.s32.totalorder %s20, 1
      %p78 = por %p76, %p77
      %p80 = scmp.ne.s32.totalorder %s65, %s79
      %p81 = scmp.eq.s32.totalorder %s20, 0
      %p82 = por %p80, %p81
      %s84 = sadd.s32 %s83, 1
      %p87 = scmp.eq.s32.totalorder %s14, 1
      %p88 = scmp.ne.s32.totalorder %s83, %s85
      %p89 = scmp.eq.s32.totalorder %s14, 0
      %p90 = por %p88, %p89
      %p91 = scmp.ne.s32.totalorder %s83, %s85
      %p92 = scmp.eq.s32.totalorder %s19, 1
      %p93 = por %p91, %p92
      %p94 = scmp.ne.s32.totalorder %s85, %s86
      %p95 = scmp.eq.s32.totalorder %s19, 0
      %p96 = por %p94, %p95
      %p97 = scmp.ne.s32.totalorder %s85, %s86
      %p98 = scmp.eq.s32.totalorder %s20, 1
      %p99 = por %p97, %p98
      %p101 = scmp.ne.s32.totalorder %s86, %s100
      %p102 = scmp.eq.s32.totalorder %s20, 0
      %p103 = por %p101, %p102
      %s105 = sadd.s32 %s104, 1
      %p108 = scmp.eq.s32.totalorder %s14, 1
      %p109 = scmp.ne.s32.totalorder %s104, %s106
      %p110 = scmp.eq.s32.totalorder %s14, 0
      %p111 = por %p109, %p110
      %p112 = scmp.ne.s32.totalorder %s104, %s106
      %p113 = scmp.eq.s32.totalorder %s19, 1
      %p114 = por %p112, %p113
      %p115 = scmp.ne.s32.totalorder %s106, %s107
      %p116 = scmp.eq.s32.totalorder %s19, 0
      %p117 = por %p115, %p116
      %p118 = scmp.ne.s32.totalorder %s106, %s107
      %p119 = scmp.eq.s32.totalorder %s20, 1
      %p120 = por %p118, %p119
      %p122 = scmp.ne.s32.totalorder %s107, %s121
      %p123 = scmp.eq.s32.totalorder %s20, 0
      %p124 = por %p122, %p123
      %s126 = sadd.s32 %s125, 1
      %p129 = scmp.eq.s32.totalorder %s14, 1
      %p130 = scmp.ne.s32.totalorder %s125, %s127
      %p131 = scmp.eq.s32.totalorder %s14, 0
      %p132 = por %p130, %p131
      %p133 = scmp.ne.s32.totalorder %s125, %s127
      %p134 = scmp.eq.s32.totalorder %s19, 1
      %p135 = por %p133, %p134
      %p136 = scmp.ne.s32.totalorder %s127, %s128
      %p137 = scmp.eq.s32.totalorder %s19, 0
      %p138 = por %p136, %p137
      %p139 = scmp.ne.s32.totalorder %s127, %s128
      %p140 = scmp.eq.s32.totalorder %s20, 1
      %p141 = por %p139, %p140
      %p143 = scmp.ne.s32.totalorder %s128, %s142
      %p144 = scmp.eq.s32.totalorder %s20, 0
      %p145 = por %p143, %p144
      %s146 = ssub.s32 %s21, %s33
      %s147 = ssub.s32 %s22, %s29
      %s148 = sor.u32 %s146, %s147
      %p149 = scmp.eq.s32.totalorder %s148, 0
      %s151 = sadd.s32 %s150, 1
      %s152 = scalar_select %p149, %s150, %s151
      %p155 = pneg %p149
      %p156 = scmp.eq.s32.totalorder %s14, 1
      %p157 = por %p155, %p156
      %p158 = scmp.ne.s32.totalorder %s150, %s153
      %p159 = scmp.eq.s32.totalorder %s14, 0
      %p160 = por %p158, %p159
      %p161 = scmp.ne.s32.totalorder %s150, %s153
      %p162 = scmp.eq.s32.totalorder %s19, 1
      %p163 = por %p161, %p162
      %p164 = scmp.ne.s32.totalorder %s153, %s154
      %p165 = scmp.eq.s32.totalorder %s19, 0
      %p166 = por %p164, %p165
      %p167 = scmp.ne.s32.totalorder %s153, %s154
      %p168 = scmp.eq.s32.totalorder %s20, 1
      %p169 = por %p167, %p168
      %p171 = scmp.ne.s32.totalorder %s154, %s170
      %p172 = scmp.eq.s32.totalorder %s20, 0
      %p173 = por %p171, %p172
      %p174 = scmp.le.s32.totalorder 1, %s14
      %p175 = scmp.lt.s32.totalorder %s14, 3
      %p176 = pnand %p174, %p175
      %p177 = pneg %p176
      // Predicated region
      $region9: #{tpu_custom_call.1} parent=5 // pred_check
        _
      $region10: #{tpu_custom_call.1} parent=5 // pred_check_branch
        %179 = sbr.rel (%p176) target = $region12
      $region11: #{tpu_custom_call.1} parent=5 // pred_region
        %s180 = ssub.s32 %s14, 1
        // Predicated region
        $region13: #{tpu_custom_call.1} parent=11 // pred_check
          %p181 = pneg %p75
        $region14: #{tpu_custom_call.1} parent=11 // pred_check_branch
          %183 = sbr.rel (%p181) target = $region16
        $region15: #{tpu_custom_call.1} parent=11 // pred_region
          _
        $region16: #{tpu_custom_call.1} parent=11 // pred_fallthru
          _
        // Predicated region
        $region17: #{tpu_custom_call.1} parent=11 // pred_check
          %p184 = pneg %p96
        $region18: #{tpu_custom_call.1} parent=11 // pred_check_branch
          %186 = sbr.rel (%p184) target = $region20
        $region19: #{tpu_custom_call.1} parent=11 // pred_region
          _
        $region20: #{tpu_custom_call.1} parent=11 // pred_fallthru
          _
        // Predicated region
        $region21: #{tpu_custom_call.1} parent=11 // pred_check
          %p187 = pneg %p117
        $region22: #{tpu_custom_call.1} parent=11 // pred_check_branch
          %189 = sbr.rel (%p187) target = $region24
        $region23: #{tpu_custom_call.1} parent=11 // pred_region
          _
        $region24: #{tpu_custom_call.1} parent=11 // pred_fallthru
          _
        // Predicated region
        $region25: #{tpu_custom_call.1} parent=11 // pred_check
          %p190 = pneg %p138
        $region26: #{tpu_custom_call.1} parent=11 // pred_check_branch
          %192 = sbr.rel (%p190) target = $region28
        $region27: #{tpu_custom_call.1} parent=11 // pred_region
          _
        $region28: #{tpu_custom_call.1} parent=11 // pred_fallthru
          _
      $region12: #{tpu_custom_call.1} parent=5 // pred_fallthru
        _
      %p193 = scmp.lt.s32.totalorder %s14, 2
      // Predicated region
      $region29: #{tpu_custom_call.1} parent=5 // pred_check
        %p194 = pneg %p193
      $region30: #{tpu_custom_call.1} parent=5 // pred_check_branch
        %196 = sbr.rel (%p194) target = $region32
      $region31: #{tpu_custom_call.1} parent=5 // pred_region
        // Predicated region
        $region33: #{tpu_custom_call.1} parent=31 // pred_check
          %p197 = pneg %p48
        $region34: #{tpu_custom_call.1} parent=31 // pred_check_branch
          %199 = sbr.rel (%p197) target = $region36
        $region35: #{tpu_custom_call.1} parent=31 // pred_region
          %s200 = smul.u32 2, %s22
          %p201 = scmp.lt.s32.totalorder %s21, 1
          %s202 = scalar_select %p201, %s21, 1
          %p203 = scmp.lt.s32.totalorder %s200, 1
          %s204 = scalar_select %p203, %s200, 1
          %s205 = smul.addr %s202, 2
          %s206 = sadd.s32 %s204, %s205
          %s207 = smul.addr %s206, 4
          %s208 = scalar_lea.vmem %s0, %s207
          %s209 = smul.u32 2, %s22
        $region36: #{tpu_custom_call.1} parent=31 // pred_fallthru
          _
      $region32: #{tpu_custom_call.1} parent=5 // pred_fallthru
        _
      %p210 = scmp.le.s32.totalorder 1, %s14
      %p211 = scmp.lt.s32.totalorder %s14, 3
      %p212 = pnand %p210, %p211
      %p213 = pneg %p212
      // Predicated region
      $region37: #{tpu_custom_call.1} parent=5 // pred_check
        _
      $region38: #{tpu_custom_call.1} parent=5 // pred_check_branch
        %215 = sbr.rel (%p212) target = $region40
      $region39: #{tpu_custom_call.1} parent=5 // pred_region
        %s216 = ssub.s32 %s14, 1
        %s217 = smul.u32 2, %s24
        %p218 = scmp.lt.s32.totalorder %s23, 1
        %s219 = scalar_select %p218, %s23, 1
        %p220 = scmp.lt.s32.totalorder %s217, 1
        %s221 = scalar_select %p220, %s217, 1
        %s222 = smul.addr %s219, 2
        %s223 = sadd.s32 %s221, %s222
        %s224 = smul.addr %s223, 4
        %s225 = scalar_lea.vmem %s0, %s224
        %p226 = pneg %p54
        %p227 = pneg %p51
        %p228 = pneg %p75
        %p229 = pneg %p72
        %p230 = pneg %p96
        %p231 = pneg %p93
        %p232 = pneg %p117
        %p233 = pneg %p114
        %p234 = pneg %p138
        %p235 = pneg %p135
        %p236 = pneg %p166
        %p237 = pneg %p163
        %s238 = sand.u32 %s153, 1
        %s239 = scalar_lea.sflag [#allocation3], %s238
        %s240 = sand.u32 %s153, 1
        %s241 = smul.addr %s240, 16
        %s242 = scalar_lea.vmem [#allocation2], %s241
        %s243 = smul.u32 2, %s24
        %p244 = scmp.lt.s32.totalorder %s23, 1
        %s245 = scalar_select %p244, %s23, 1
        %p246 = scmp.lt.s32.totalorder %s243, 1
        %s247 = scalar_select %p246, %s243, 1
        %s248 = smul.addr %s245, 2
        %s249 = sadd.s32 %s247, %s248
        %s250 = smul.addr %s249, 4
        %s251 = scalar_lea.vmem %s0, %s250
        %s252 = smul.u32 2, %s24
        %s253 = smul.u32 2, %s24
        %v255 = vld [vmem:[%s251] sm:$0xff]
        %v257 = vcombine.high %v255, %v255
        %v259 = vpack.c.bf16 %v255, %v255
        %v260 = vpack.c.bf16 %v257, %v257
        %v261 = vld [vmem:[%s1] sm:$0xf]
        %v262 = vld [vmem:[%s1 + $0x4] sm:$0xf]
        %v263 = vld [vmem:[%s1 + $0x8] sm:$0xf]
        %v264 = vld [vmem:[%s1 + $0xc] sm:$0xf]
        %v265 = vld [vmem:[%s2] sm:$0xff]
        %v266 = vld [vmem:[%s2 + $0x8] sm:$0xff]
        %v267 = vld [vmem:[%s2 + $0x10] sm:$0xff]
        %v268 = vld [vmem:[%s2 + $0x18] sm:$0xff]
        %270 = vset.pattern.permute.xlu0 0
        %271 = vperm.xlu0 %270, %v265
        %v272 = vpop.permute.xlu0 %271
        %275 = vset.pattern.permute.xlu0 0
        %276 = vperm.xlu0 %275, %v266
        %v277 = vpop.permute.xlu0 %276
        %280 = vset.pattern.permute.xlu0 0
        %281 = vperm.xlu0 %280, %v267
        %v282 = vpop.permute.xlu0 %281
        %285 = vset.pattern.permute.xlu0 0
        %286 = vperm.xlu0 %285, %v268
        %v287 = vpop.permute.xlu0 %286
        %v293 = vunpack.c.l.b16 %v261
        %v294 = vunpack.c.l.b16 %v262
        %v295 = vunpack.c.l.b16 %v263
        %v296 = vunpack.c.l.b16 %v264
        %v297 = vpack.c.b16 %v294, %v293
        %v298 = vpack.c.b16 %v296, %v295
        %vm299 = vcmask 31744
        %v301 = vsel %vm299, %v297, 0
        %v304 = vsel %vm299, %v298, 0
        %vm306 = vcmask 1041408
        %v308 = vsel %vm306, %v259, 0
        %v311 = vsel %vm306, %v260, 0
        %313 = vmatprep.subr.bf16.mxu0 %v311
        %314 = vmatpush1.bf16.msra.mxu0 %v308
        %315 = vmatprep.subr.bf16.mxu0 0
        %316 = vmatpush1.bf16.msra.mxu0 0
        %317 = vmatprep.subr.bf16.mxu0 0
        %318 = vmatpush1.bf16.msra.mxu0 0
        %319 = vmatprep.subr.bf16.mxu0 0
        %320 = vmatpush1.bf16.msra.mxu0 0
        %321 = vmatprep.subr.bf16.mxu0 0
        %322 = vmatpush1.bf16.msra.mxu0 0
        %323 = vmatprep.subr.bf16.mxu0 0
        %324 = vmatpush1.bf16.msra.mxu0 0
        %325 = vmatprep.subr.bf16.mxu0 0
        %326 = vmatpush1.bf16.msra.mxu0 0
        %327 = vmatprep.subr.bf16.mxu0 0
        %328 = vmatpush1.bf16.msra.mxu0 0
        %329 = vmatprep.subr.bf16.mxu0 0
        %330 = vmatpush1.bf16.msra.mxu0 0
        %331 = vmatprep.subr.bf16.mxu0 0
        %332 = vmatpush1.bf16.msra.mxu0 0
        %333 = vmatprep.subr.bf16.mxu0 0
        %334 = vmatpush1.bf16.msra.mxu0 0
        %335 = vmatprep.subr.bf16.mxu0 0
        %336 = vmatpush1.bf16.msra.mxu0 0
        %337 = vmatprep.subr.bf16.mxu0 0
        %338 = vmatpush1.bf16.msra.mxu0 0
        %339 = vmatprep.subr.bf16.mxu0 0
        %340 = vmatpush1.bf16.msra.mxu0 0
        %341 = vmatprep.subr.bf16.mxu0 0
        %342 = vmatpush1.bf16.msra.mxu0 0
        %343 = vmatprep.subr.bf16.mxu0 0
        %344 = vmatpush1.bf16.msra.mxu0 0
        %345 = vmatprep.mubr.bf16.mxu0 0
        %346 = vmatmul.mubr.bf16.gmra.mrb[0].mxu0 %v301
        %v347 = vpop.f32.mrb[0].mxu0
        %v348 = vadd.f32 %v272, %v347
        %v349 = vpop.f32.mrb[0].mxu0
        %v350 = vadd.f32 %v272, %v349
        %v351 = vpop.f32.mrb[0].mxu0
        %v352 = vadd.f32 %v277, %v351
        %v353 = vpop.f32.mrb[0].mxu0
        %v354 = vadd.f32 %v277, %v353
        %355 = vmatprep.mubr.bf16.mxu0 0
        %356 = vmatmul.mubr.bf16.gmra.mrb[0].mxu0 %v304
        %v357 = vpop.f32.mrb[0].mxu0
        %v358 = vadd.f32 %v282, %v357
        %v359 = vpop.f32.mrb[0].mxu0
        %v360 = vadd.f32 %v282, %v359
        %v361 = vpop.f32.mrb[0].mxu0
        %v362 = vadd.f32 %v287, %v361
        %v363 = vpop.f32.mrb[0].mxu0
        %v364 = vadd.f32 %v287, %v363
        %365 = vdwg.mxu0
        %v366 = vmax.f32 %v348, 0.0
        %v367 = vmax.f32 %v350, 0.0
        %v368 = vmax.f32 %v352, 0.0
        %v369 = vmax.f32 %v354, 0.0
        %v370 = vmax.f32 %v358, 0.0
        %v371 = vmax.f32 %v360, 0.0
        %v372 = vmax.f32 %v362, 0.0
        %v373 = vmax.f32 %v364, 0.0
        %v374 = vld [vmem:[%s3] sm:$0xf]
        %v375 = vpack.c.bf16 %v368, %v366
        %v376 = vpack.c.bf16 %v369, %v367
        %v377 = vpack.c.bf16 %v372, %v370
        %v378 = vpack.c.bf16 %v373, %v371
        %v379 = vld [vmem:[%s4] sm:$0xff]
        %381 = vset.pattern.permute.xlu0 0
        %382 = vperm.xlu0 %381, %v379
        %v383 = vpop.permute.xlu0 %382
        %vm385 = vcmask 261120
        %v387 = vsel %vm385, %v374, 0
        %389 = vmatprep.subr.bf16.mxu0 %v376
        %390 = vmatpush1.bf16.msra.mxu0 %v375
        %391 = vmatprep.subr.bf16.mxu0 %v378
        %392 = vmatpush1.bf16.msra.mxu0 %v377
        %393 = vmatprep.subr.bf16.mxu0 0
        %394 = vmatpush1.bf16.msra.mxu0 0
        %395 = vmatprep.subr.bf16.mxu0 0
        %396 = vmatpush1.bf16.msra.mxu0 0
        %397 = vmatprep.subr.bf16.mxu0 0
        %398 = vmatpush1.bf16.msra.mxu0 0
        %399 = vmatprep.subr.bf16.mxu0 0
        %400 = vmatpush1.bf16.msra.mxu0 0
        %401 = vmatprep.subr.bf16.mxu0 0
        %402 = vmatpush1.bf16.msra.mxu0 0
        %403 = vmatprep.subr.bf16.mxu0 0
        %404 = vmatpush1.bf16.msra.mxu0 0
        %405 = vmatprep.subr.bf16.mxu0 0
        %406 = vmatpush1.bf16.msra.mxu0 0
        %407 = vmatprep.subr.bf16.mxu0 0
        %408 = vmatpush1.bf16.msra.mxu0 0
        %409 = vmatprep.subr.bf16.mxu0 0
        %410 = vmatpush1.bf16.msra.mxu0 0
        %411 = vmatprep.subr.bf16.mxu0 0
        %412 = vmatpush1.bf16.msra.mxu0 0
        %413 = vmatprep.subr.bf16.mxu0 0
        %414 = vmatpush1.bf16.msra.mxu0 0
        %415 = vmatprep.subr.bf16.mxu0 0
        %416 = vmatpush1.bf16.msra.mxu0 0
        %417 = vmatprep.subr.bf16.mxu0 0
        %418 = vmatpush1.bf16.msra.mxu0 0
        %419 = vmatprep.subr.bf16.mxu0 0
        %420 = vmatpush1.bf16.msra.mxu0 0
        %421 = vmatprep.mubr.bf16.mxu0 0
        %422 = vmatmul.mubr.bf16.gmra.mrb[0].mxu0 %v387
        %v423 = vpop.f32.mrb[0].mxu0
        %v424 = vadd.f32 %v383, %v423
        %v425 = vpop.f32.mrb[0].mxu0
        %v426 = vadd.f32 %v383, %v425
        %v427 = vpop.f32.mrb[0].mxu0
        %v428 = vpop.f32.mrb[0].mxu0
        %429 = vdwg.mxu0
        %430 = vst [vmem:[%s242] sm:$0xff] %v424
        %431 = vst [vmem:[%s242 + $0x8] sm:$0xff] %v426
        %s432 = sand.u32 %s153, 1
        %s433 = scalar_lea.sflag [#allocation3], %s432
        %s434 = sand.u32 %s153, 1
        %s435 = smul.addr %s434, 16
        %s436 = scalar_lea.vmem [#allocation2], %s435
        // Predicated region
        $region41: #{tpu_custom_call.1} parent=39 // pred_check
          %p437 = pneg %p163
        $region42: #{tpu_custom_call.1} parent=39 // pred_check_branch
          %439 = sbr.rel (%p437) target = $region44
        $region43: #{tpu_custom_call.1} parent=39 // pred_region
          %s440 = smul.u32 2, %s24
          %s442 = ssub.s32 256, 256
          %443 = vsyncadd %s433, %s442
          %s444 = smul.addr %s23, 2
          %s445 = sadd.s32 %s440, %s444
          %s446 = smul.addr %s445, 128
          %s447 = scalar_lea.hbm %s5, %s446
          %s449 = sshll.u32 %s436, 4
          %s450 = int_to_ptr.vmem [resolvable:$true] %s449
          %452 = dma.vmem_to_hbm [thread:$0]  %s450, 256, %s447, %s433
        $region44: #{tpu_custom_call.1} parent=39 // pred_fallthru
          _
      $region40: #{tpu_custom_call.1} parent=5 // pred_fallthru
        _
      %p453 = scmp.le.s32.totalorder 2, %s14
      // Predicated region
      $region45: #{tpu_custom_call.1} parent=5 // pred_check
        %p454 = pneg %p453
      $region46: #{tpu_custom_call.1} parent=5 // pred_check_branch
        %456 = sbr.rel (%p454) target = $region48
      $region47: #{tpu_custom_call.1} parent=5 // pred_region
        %s457 = ssub.s32 %s14, 2
        // Predicated region
        $region49: #{tpu_custom_call.1} parent=47 // pred_check
          %p458 = pneg %p169
        $region50: #{tpu_custom_call.1} parent=47 // pred_check_branch
          %460 = sbr.rel (%p458) target = $region52
        $region51: #{tpu_custom_call.1} parent=47 // pred_region
          %s461 = sand.u32 %s154, 1
          %s462 = scalar_lea.sflag [#allocation3], %s461
          %s463 = sand.u32 %s154, 1
          %s464 = smul.addr %s463, 16
          %s465 = scalar_lea.vmem [#allocation2], %s464
          %466 = dma.done %s462, 256
        $region52: #{tpu_custom_call.1} parent=47 // pred_fallthru
          _
      $region48: #{tpu_custom_call.1} parent=5 // pred_fallthru
        _
    $region6: #{tpu_custom_call.1} parent=1 // loop_footer
      %s18 = sadd.s32 1, %s14
    $region7: #{tpu_custom_call.1} parent=1 // loop_footer_branch
      %13 = sbr.rel target = $region3
    $region8: #{tpu_custom_call.1} parent=1 // loop_exit
      _
    %467 = vsyncpa [#allocation3], 1
    %s468 = scalar_lea.sflag [#allocation3], 1
    %469 = vsyncpa %s468, 1

</llo_original>
